<compile_context>
chip_gen: v7x
topology: tpu7x:2x2x1
jax: 0.10.0
libtpu: 0.0.40
codegen_flags: <defaults>
</compile_context>

<pallas_src>
import functools

import jax
import jax.numpy as jnp
from jax.experimental import pallas as pl
from jax.experimental.pallas import tpu as pltpu

_LANE = 128
# ~4 MiB per array per block: >= ~86% of HBM roofline on v6e, still only
# 24 MiB of double-buffered scoped VMEM (3 arrays x 2 buffers), safe on v7x.
_TARGET_BLOCK_BYTES = 4 << 20
_VMEM_LIMIT_BYTES = 48 << 20  # > default 16/32 MiB, < v7x 64 MiB physical.


def _ema_kernel(x_ref, shadow_ref, out_ref, *, mu: float):
    # mu is a compile-time constant. Blend in f32 regardless of param dtype:
    #   new = shadow + mu * (x - shadow)  ==  mu*x + (1-mu)*shadow
    x = x_ref[...].astype(jnp.float32)
    s = shadow_ref[...].astype(jnp.float32)
    out_ref[...] = (s + mu * (x - s)).astype(out_ref.dtype)


def _pick_width(n: int) -> int:
    """Largest lane-dense width (multiple of 128) that divides n, else 0."""
    for cand in (4096, 2048, 1024, 512, 256, 128):
        if n % cand == 0:
            return cand
    return 0


@functools.partial(jax.jit, static_argnums=(0,), donate_argnums=(2,))
def _ema_update(mu: float, x: jax.Array, shadow: jax.Array) -> jax.Array:
    """new_average = mu*x + (1-mu)*shadow, elementwise, in-place on shadow."""
    assert x.shape == shadow.shape and x.dtype == shadow.dtype
    orig_shape = x.shape
    out_dtype = x.dtype
    n = x.size
    itemsize = jnp.dtype(out_dtype).itemsize
    # Sublane packing granularity: 8 rows for f32, 16 for bf16/fp16, 32 for 8-bit.
    sub = max(8, 32 // itemsize)

    kernel = functools.partial(_ema_kernel, mu=float(mu))
    common = dict(
        input_output_aliases={1: 0},  # overwrite shadow in place
        compiler_params=pltpu.CompilerParams(
            dimension_semantics=("parallel",),
            vmem_limit_bytes=_VMEM_LIMIT_BYTES,
        ),
        cost_estimate=pl.CostEstimate(
            flops=3 * n,
            transcendentals=0,
            bytes_accessed=3 * n * itemsize,
        ),
    )

    wide = _pick_width(n)
    if wide > 0:
        # ---- 2-D lane-dense path (common case: n divisible by 128) ----
        rows = n // wide
        x2 = x.reshape(rows, wide)
        s2 = shadow.reshape(rows, wide)

        if rows <= sub:
            row_tile = rows  # full-extent block (always legal)
        else:
            row_tile = min(max(_TARGET_BLOCK_BYTES // (wide * itemsize), sub), rows)
            # Force >= 2 grid steps so the v7x megacore can shard the stream
            # across both TensorCores (harmless one extra step on v5e/v6e).
            if row_tile >= rows and rows >= 2 * sub:
                row_tile = rows // 2
            row_tile = max(sub, (row_tile // sub) * sub)
            row_tile = min(row_tile, rows)
        grid = (pl.cdiv(rows, row_tile),)

        out2 = pl.pallas_call(
            kernel,
            out_shape=jax.ShapeDtypeStruct((rows, wide), out_dtype),
            grid=grid,
            in_specs=[
                pl.BlockSpec((row_tile, wide), lambda i: (i, 0)),  # x
                pl.BlockSpec((row_tile, wide), lambda i: (i, 0)),  # shadow
            ],
            out_specs=pl.BlockSpec((row_tile, wide), lambda i: (i, 0)),
            **common,
        )(x2, s2)
        return out2.reshape(orig_shape)

    # ---- 1-D masked path (n not divisible by 128): no pad, no extra copies,
    # aliasing preserved; Pallas masks the partial last block. ----
    xf = x.reshape(-1)
    sf = shadow.reshape(-1)
    target = max(1024, (_TARGET_BLOCK_BYTES // itemsize) // 1024 * 1024)
    if n < 2 * _LANE:
        blk = n  # single full-extent block
    else:
        blk = min(target, max(_LANE, (n // 2) // _LANE * _LANE))
    grid = (pl.cdiv(n, blk),)

    outf = pl.pallas_call(
        kernel,
        out_shape=jax.ShapeDtypeStruct((n,), out_dtype),
        grid=grid,
        in_specs=[
            pl.BlockSpec((blk,), lambda i: (i,)),  # x
            pl.BlockSpec((blk,), lambda i: (i,)),  # shadow
        ],
        out_specs=pl.BlockSpec((blk,), lambda i: (i,)),
        **common,
    )(xf, sf)
    return outf.reshape(orig_shape)


class EMA:
    """JAX/Pallas port of the PyTorch EMA module."""

    def __init__(self, mu: float) -> None:
        self.mu = float(mu)
        self.shadow = {}

    def register(self, name: str, val: jax.Array) -> None:
        self.shadow[name] = jnp.array(val)  # clone

    def __call__(self, name: str, x: jax.Array) -> jax.Array:
        assert name in self.shadow
        # shadow buffer is donated to the update and overwritten in place.
        new_average = _ema_update(self.mu, x, self.shadow[name])
        self.shadow[name] = new_average
        return new_average

    # nn.Module-style alias
    forward = __call__


if __name__ == "__main__":
    key = jax.random.PRNGKey(0)
    k1, k2, k3, k4 = jax.random.split(key, 4)

    mu = 0.9
    ema = EMA(mu)

    # Main test: small NCHW tensor, consistent with a conv-parameter EMA use.
    B, C, H, W = 2, 4, 16, 16
    x = jax.random.normal(k1, (B, C, H, W), dtype=jnp.float32)
    init_val = jax.random.normal(k2, (B, C, H, W), dtype=jnp.float32)
    ref = mu * x + (1.0 - mu) * init_val  # reference computed before donation

    ema.register("param", init_val)
    out = jax.block_until_ready(ema("param", x))
    assert jnp.allclose(out, ref, atol=1e-5, rtol=1e-5), "mismatch vs reference"
    assert jnp.allclose(ema.shadow["param"], ref, atol=1e-5, rtol=1e-5)

    # Secondary test: size not divisible by 128 exercises the 1-D masked path
    # (no pad copies, partial last block, aliasing preserved).
    x_odd = jax.random.normal(k3, (3, 7, 13), dtype=jnp.float32)
    s_odd = jax.random.normal(k4, (3, 7, 13), dtype=jnp.float32)
    ref_odd = mu * x_odd + (1.0 - mu) * s_odd

    ema.register("odd", s_odd)
    out_odd = jax.block_until_ready(ema("odd", x_odd))
    assert jnp.allclose(out_odd, ref_odd, atol=1e-5, rtol=1e-5), "odd-size mismatch"
    assert jnp.allclose(ema.shadow["odd"], ref_odd, atol=1e-5, rtol=1e-5)

    print("KERNEL_OK")
</pallas_src>

<mosaic_0001>
module attributes {stable_mosaic.version = 11 : i64} {
  func.func @_ema_kernel(%arg0: i32, %arg1: memref<1x2048xf32, #tpu.memory_space<vmem>>, %arg2: memref<1x2048xf32, #tpu.memory_space<vmem>>, %arg3: memref<1x2048xf32, #tpu.memory_space<vmem>>) attributes {dimension_semantics = [#tpu.dimension_semantics<parallel>], iteration_bounds = array<i64: 1>, scalar_prefetch = 0 : i64, scratch_operands = 0 : i64, tpu.core_type = #tpu.core_type<tc>, window_params = [{transform_indices = @transform_0, window_bounds = array<i64: 1, 2048>}, {transform_indices = @transform_1, window_bounds = array<i64: 1, 2048>}, {transform_indices = @transform_2, window_bounds = array<i64: 1, 2048>}]} {
    %c0 = arith.constant 0 : index
    %c0_0 = arith.constant 0 : index
    %0 = vector.load %arg1[%c0, %c0_0] : memref<1x2048xf32, #tpu.memory_space<vmem>>, vector<1x2048xf32>
    %c0_1 = arith.constant 0 : index
    %c0_2 = arith.constant 0 : index
    %1 = vector.load %arg2[%c0_1, %c0_2] : memref<1x2048xf32, #tpu.memory_space<vmem>>, vector<1x2048xf32>
    %2 = arith.subf %0, %1 : vector<1x2048xf32>
    %cst = arith.constant 0.899999976 : f32
    %3 = vector.broadcast %cst : f32 to vector<1x2048xf32>
    %4 = arith.mulf %3, %2 : vector<1x2048xf32>
    %5 = arith.addf %1, %4 : vector<1x2048xf32>
    %c0_3 = arith.constant 0 : index
    %c0_4 = arith.constant 0 : index
    %6 = vector.load %arg3[%c0_3, %c0_4] : memref<1x2048xf32, #tpu.memory_space<vmem>>, vector<1x2048xf32>
    tpu.vector_store %arg3[%c0_3, %c0_4], %5 {strides = array<i32>} : memref<1x2048xf32, #tpu.memory_space<vmem>>, vector<1x2048xf32>,
    return
  }
  func.func @transform_0(%arg0: i32) -> (i32, i32) {
    %c0_i32 = arith.constant 0 : i32
    %c0_i32_0 = arith.constant 0 : i32
    return %arg0, %c0_i32 : i32, i32
  }
  func.func @transform_1(%arg0: i32) -> (i32, i32) {
    %c0_i32 = arith.constant 0 : i32
    %c0_i32_0 = arith.constant 0 : i32
    return %arg0, %c0_i32 : i32, i32
  }
  func.func @transform_2(%arg0: i32) -> (i32, i32) {
    %c0_i32 = arith.constant 0 : i32
    %c0_i32_0 = arith.constant 0 : i32
    return %arg0, %c0_i32 : i32, i32
  }
}

</mosaic_0001>

<llo_original>
// kernel: _ema_update.1
$region0: #{_ema_update.1}
  #allocation0 [shape = 'u32[]', space=smem, size = 0x4, offset = 0x4, fixed_abs, tag = 'smem constant byte address 0x4 - core index']
  #allocation1 [shape = 'u32[144,128]{1,0:T(1,128)}', space=vmem, size = 0x12000, scoped, tag = 'internal scratch']
  %s0 = inlined_call_operand.vmem [shape: f32[1,2048], index: 0, kind: input, shape index: {}]
  %s1 = inlined_call_operand.vmem [shape: f32[1,2048], index: 1, kind: input, shape index: {}, may-alias: {1,2}]
  %s2 = inlined_call_operand.vmem [shape: f32[1,2048], index: 2, kind: output, shape index: {}, may-alias: {1,2}]
  %s3 = sld [smem:[#allocation0]]
  $region18: #{_ema_update.1} parent=0
    _
  %s5 = ssub.s32 1, %s3
  %s6 = scalar_select 0, %s5, %s3
  // Predicated region
  $region2: #{_ema_update.1} parent=0 // pred_check
    _
  $region3: #{_ema_update.1} parent=0 // pred_check_branch
    %8 = sbr.rel (0) target = $region5
  $region4: #{_ema_update.1} parent=0 // pred_region
    _
  $region5: #{_ema_update.1} parent=0 // pred_fallthru
    _
  // Predicated region
  $region6: #{_ema_update.1} parent=0 // pred_check
    _
  $region7: #{_ema_update.1} parent=0 // pred_check_branch
    %10 = sbr.rel (0) target = $region9
  $region8: #{_ema_update.1} parent=0 // pred_region
    _
  $region9: #{_ema_update.1} parent=0 // pred_fallthru
    _
  %v11 = vld [vmem:[%s0] sm:$0xff]
  %v12 = vld [vmem:[%s0 + $0x8] sm:$0xff]
  %v13 = vld [vmem:[%s1] sm:$0xff]
  %v14 = vld [vmem:[%s1 + $0x8] sm:$0xff]
  %v15 = vsub.f32 %v11, %v13
  %v16 = vsub.f32 %v12, %v14
  %v17 = vmul.f32 %v15, 0.9
  %v18 = vmul.f32 %v16, 0.9
  %v19 = vadd.f32 %v13, %v17
  %v20 = vadd.f32 %v14, %v18
  %21 = vst [vmem:[%s2] sm:$0xff] %v19
  %22 = vst [vmem:[%s2 + $0x8] sm:$0xff] %v20
  // Predicated region
  $region10: #{_ema_update.1} parent=0 // pred_check
    _
  $region11: #{_ema_update.1} parent=0 // pred_check_branch
    %24 = sbr.rel (0) target = $region13
  $region12: #{_ema_update.1} parent=0 // pred_region
    _
  $region13: #{_ema_update.1} parent=0 // pred_fallthru
    _
  // Predicated region
  $region14: #{_ema_update.1} parent=0 // pred_check
    _
  $region15: #{_ema_update.1} parent=0 // pred_check_branch
    %26 = sbr.rel (0) target = $region17
  $region16: #{_ema_update.1} parent=0 // pred_region
    _
  $region17: #{_ema_update.1} parent=0 // pred_fallthru
    _

</llo_original>
